<compile_context>
chip_gen: v6e
topology: v6e:2x2x1
jax: 0.10.0
libtpu: 0.0.40
codegen_flags: <defaults>
</compile_context>

<pallas_src>
import functools
import math

import jax
import jax.numpy as jnp
from jax.experimental import pallas as pl
from jax.experimental.pallas import tpu as pltpu


VMEM_LIMIT_BYTES = 48 * 1024 * 1024   # leave headroom vs. v7x's 64 MiB per TC


# ------------------------------ small helpers --------------------------------

def _round_up(x, m):
    return ((x + m - 1) // m) * m


def _tile(dim, target, align):
    """Largest tile <= target that is a multiple of `align` and evenly divides
    `dim`; retries with smaller alignments; returns the full dim for small /
    irregular dims (callers pre-pad the dims that can be large & irregular,
    i.e. the vocab)."""
    if dim <= target:
        return dim
    a = align
    while a >= 8:
        t = (target // a) * a
        while t >= a:
            if dim % t == 0:
                return t
            t -= a
        a //= 2
    return dim


def _heads_per_block(n_heads, head_dim):
    """Smallest divisor of n_heads whose combined width is lane-dense (>=128)."""
    for hpb in range(1, n_heads + 1):
        if n_heads % hpb == 0 and hpb * head_dim >= 128:
            return hpb
    return n_heads


# ------------------------- tiled matmul (+bias/GELU) --------------------------

def _linear_kernel(x_ref, w_ref, b_ref, o_ref, acc_ref, *, activation, nk):
    k = pl.program_id(2)

    @pl.when(k == 0)
    def _():
        acc_ref[...] = jnp.zeros_like(acc_ref)

    acc_ref[...] += jnp.dot(x_ref[...], w_ref[...],
                            preferred_element_type=jnp.float32)

    @pl.when(k == nk - 1)
    def _():
        out = acc_ref[...] + b_ref[...]
        if activation == "gelu":
            # TODO(synk): BERT uses exact erf-GELU; tanh approximation used here.
            out = 0.5 * out * (1.0 + jnp.tanh(
                0.7978845608028654 * (out + 0.044715 * out * out * out)))
        o_ref[...] = out.astype(o_ref.dtype)


def linear(x, w, b, activation=None, out_dtype=jnp.bfloat16,
           tm_target=256, tn_target=512, tk_target=512):
    M, K = x.shape
    N = w.shape[1]
    tm = _tile(M, tm_target, 16)
    tn = _tile(N, tn_target, 256)
    tk = _tile(K, tk_target, 256)
    nk = K // tk
    return pl.pallas_call(
        functools.partial(_linear_kernel, activation=activation, nk=nk),
        grid=(M // tm, N // tn, nk),
        in_specs=[pl.BlockSpec((tm, tk), lambda i, j, k: (i, k)),
                  pl.BlockSpec((tk, tn), lambda i, j, k: (k, j)),
                  pl.BlockSpec((1, tn), lambda i, j, k: (0, j))],
        out_specs=pl.BlockSpec((tm, tn), lambda i, j, k: (i, j)),
        out_shape=jax.ShapeDtypeStruct((M, N), out_dtype),
        scratch_shapes=[pltpu.VMEM((tm, tn), jnp.float32)],
        compiler_params=pltpu.CompilerParams(
            dimension_semantics=("parallel", "parallel", "arbitrary"),
            vmem_limit_bytes=VMEM_LIMIT_BYTES),
    )(x, w, b.reshape(1, N).astype(jnp.float32))


# ------------- fused matmul + bias + residual-add + layernorm -----------------

def _linear_res_ln_kernel(x_ref, w_ref, b_ref, r_ref, g_ref, bb_ref, o_ref,
                          acc_ref, *, nk, eps):
    k = pl.program_id(1)

    @pl.when(k == 0)
    def _():
        acc_ref[...] = jnp.zeros_like(acc_ref)

    acc_ref[...] += jnp.dot(x_ref[...], w_ref[...],
                            preferred_element_type=jnp.float32)

    @pl.when(k == nk - 1)
    def _():
        z = (acc_ref[...] + b_ref[...]
             + r_ref[...].astype(jnp.float32))
        mean = jnp.mean(z, axis=-1, keepdims=True)
        c = z - mean
        var = jnp.mean(c * c, axis=-1, keepdims=True)
        y = c * jax.lax.rsqrt(var + eps) * g_ref[...] + bb_ref[...]
        o_ref[...] = y.astype(o_ref.dtype)


def linear_residual_ln(x, w, b, residual, gamma, beta, eps=1e-12,
                       out_dtype=jnp.bfloat16, tm_target=256, tk_target=512):
    M, K = x.shape
    N = w.shape[1]
    tm = _tile(M, tm_target, 16)
    tk = _tile(K, tk_target, 256)
    nk = K // tk
    return pl.pallas_call(
        functools.partial(_linear_res_ln_kernel, nk=nk, eps=eps),
        grid=(M // tm, nk),
        in_specs=[pl.BlockSpec((tm, tk), lambda i, k: (i, k)),
                  pl.BlockSpec((tk, N), lambda i, k: (k, 0)),
                  pl.BlockSpec((1, N), lambda i, k: (0, 0)),
                  pl.BlockSpec((tm, N), lambda i, k: (i, 0)),
                  pl.BlockSpec((1, N), lambda i, k: (0, 0)),
                  pl.BlockSpec((1, N), lambda i, k: (0, 0))],
        out_specs=pl.BlockSpec((tm, N), lambda i, k: (i, 0)),
        out_shape=jax.ShapeDtypeStruct((M, N), out_dtype),
        scratch_shapes=[pltpu.VMEM((tm, N), jnp.float32)],
        compiler_params=pltpu.CompilerParams(
            dimension_semantics=("parallel", "arbitrary"),
            vmem_limit_bytes=VMEM_LIMIT_BYTES),
    )(x, w, b.reshape(1, N).astype(jnp.float32), residual,
      gamma.reshape(1, N), beta.reshape(1, N))


# ------------------------------- layernorm ------------------------------------

def _layernorm_kernel(x_ref, g_ref, b_ref, o_ref, *, eps):
    x = x_ref[...].astype(jnp.float32)
    mean = jnp.mean(x, axis=-1, keepdims=True)
    c = x - mean
    var = jnp.mean(c * c, axis=-1, keepdims=True)
    o_ref[...] = (c * jax.lax.rsqrt(var + eps) * g_ref[...]
                  + b_ref[...]).astype(o_ref.dtype)


def layernorm(x, g, b, eps=1e-12, out_dtype=jnp.bfloat16, tm_target=512):
    M, H = x.shape
    tm = _tile(M, tm_target, 16)
    return pl.pallas_call(
        functools.partial(_layernorm_kernel, eps=eps),
        grid=(M // tm,),
        in_specs=[pl.BlockSpec((tm, H), lambda i: (i, 0)),
                  pl.BlockSpec((1, H), lambda i: (0, 0)),
                  pl.BlockSpec((1, H), lambda i: (0, 0))],
        out_specs=pl.BlockSpec((tm, H), lambda i: (i, 0)),
        out_shape=jax.ShapeDtypeStruct((M, H), out_dtype),
        compiler_params=pltpu.CompilerParams(
            dimension_semantics=("parallel",),
            vmem_limit_bytes=VMEM_LIMIT_BYTES),
    )(x, g.reshape(1, H), b.reshape(1, H))


# ------------------------------- attention ------------------------------------

def _attention_kernel(q_ref, k_ref, v_ref, m_ref, o_ref, *, hpb, dh, scale):
    # q/k/v refs each hold `hpb` heads side by side: (1, S, hpb*dh)
    mask = m_ref[0]                                     # (1, S) additive, f32
    outs = []
    for hh in range(hpb):
        lo = hh * dh
        q = q_ref[0, :, lo:lo + dh]                     # (S, dh) bf16
        k = k_ref[0, :, lo:lo + dh]
        v = v_ref[0, :, lo:lo + dh]
        # contract last dims directly -> no materialized k.T
        s = jax.lax.dot_general(q, k, (((1,), (1,)), ((), ())),
                                preferred_element_type=jnp.float32)
        s = s * scale + mask
        mx = jnp.max(s, axis=-1, keepdims=True)
        p = jnp.exp(s - mx)
        denom = jnp.sum(p, axis=-1, keepdims=True)
        ctx = jax.lax.dot_general(p.astype(v.dtype), v, (((1,), (0,)), ((), ())),
                                  preferred_element_type=jnp.float32)
        outs.append((ctx * pl.reciprocal(denom, approx=True)).astype(o_ref.dtype))
    # single lane-dense store for the whole head-group (e.g. 2*64 = 128 lanes)
    o_ref[0] = jnp.concatenate(outs, axis=-1)
    # TODO(synk): flash-style KV tiling (online softmax over an S_kv grid axis)
    # would be needed for very long S on v7x's 64 MiB VMEM.


def attention(qkv, add_mask, *, n_heads, head_dim, scale):
    B, S, _ = qkv.shape
    H = n_heads * head_dim
    hpb = _heads_per_block(n_heads, head_dim)
    nG = n_heads // hpb          # head-groups per batch element
    wb = hpb * head_dim          # lane width handled per grid cell
    return pl.pallas_call(
        functools.partial(_attention_kernel, hpb=hpb, dh=head_dim, scale=scale),
        grid=(B, nG),
        in_specs=[pl.BlockSpec((1, S, wb), lambda b, g: (b, 0, g)),
                  pl.BlockSpec((1, S, wb), lambda b, g: (b, 0, nG + g)),
                  pl.BlockSpec((1, S, wb), lambda b, g: (b, 0, 2 * nG + g)),
                  pl.BlockSpec((1, 1, S), lambda b, g: (b, 0, 0))],
        out_specs=pl.BlockSpec((1, S, wb), lambda b, g: (b, 0, g)),
        out_shape=jax.ShapeDtypeStruct((B, S, H), jnp.bfloat16),
        compiler_params=pltpu.CompilerParams(
            dimension_semantics=("parallel", "parallel"),
            vmem_limit_bytes=VMEM_LIMIT_BYTES),
    )(qkv, qkv, qkv, add_mask)


# --------------- fused classifier matmul + cross-entropy (training) -----------

def _cls_xent_kernel(x_ref, w_ref, b_ref, lab_ref, o_ref,
                     acc_ref, m_ref, l_ref, p_ref, tot_ref, cnt_ref,
                     *, nm, nn, nk, tn):
    i = pl.program_id(0)
    j = pl.program_id(1)
    k = pl.program_id(2)

    @pl.when((i == 0) & (j == 0) & (k == 0))
    def _():
        tot_ref[...] = jnp.zeros_like(tot_ref)
        cnt_ref[...] = jnp.zeros_like(cnt_ref)

    @pl.when((j == 0) & (k == 0))
    def _():
        m_ref[...] = jnp.full_like(m_ref, -jnp.inf)
        l_ref[...] = jnp.zeros_like(l_ref)
        p_ref[...] = jnp.zeros_like(p_ref)

    @pl.when(k == 0)
    def _():
        acc_ref[...] = jnp.zeros_like(acc_ref)

    acc_ref[...] += jnp.dot(x_ref[...], w_ref[...],
                            preferred_element_type=jnp.float32)

    @pl.when(k == nk - 1)
    def _():
        logits = acc_ref[...] + b_ref[...]                    # (tm, tn) f32
        labels = lab_ref[...]                                 # (tm, 1) int32
        col = jax.lax.broadcasted_iota(jnp.int32, logits.shape, 1) + j * tn
        # target logit (0 if target not in this N-tile / label == -1)
        p_ref[...] += jnp.sum(jnp.where(col == labels, logits, 0.0),
                              axis=-1, keepdims=True)
        # online logsumexp across N-tiles
        m_new = jnp.maximum(m_ref[...],
                            jnp.max(logits, axis=-1, keepdims=True))
        l_ref[...] = (l_ref[...] * jnp.exp(m_ref[...] - m_new)
                      + jnp.sum(jnp.exp(logits - m_new), axis=-1, keepdims=True))
        m_ref[...] = m_new

    @pl.when((j == nn - 1) & (k == nk - 1))
    def _():
        labels = lab_ref[...]
        valid = (labels != -1).astype(jnp.float32)            # (tm, 1)
        lse = m_ref[...] + jnp.log(l_ref[...])
        tot_ref[...] += jnp.sum(valid * (lse - p_ref[...]), axis=0, keepdims=True)
        cnt_ref[...] += jnp.sum(valid, axis=0, keepdims=True)

    @pl.when((i == nm - 1) & (j == nn - 1) & (k == nk - 1))
    def _():
        # Matches torch CrossEntropyLoss mean reduction (NaN if all ignored).
        o_ref[...] = tot_ref[...] / cnt_ref[...]


def classifier_cross_entropy(x, w, b, labels,
                             tm_target=1024, tn_target=512, tk_target=512):
    """Fused classifier matmul + cross-entropy(ignore_index=-1); never
    materializes the (M, V) logits array.  `w`/`b` are vocab-padded."""
    M, K = x.shape
    N = w.shape[1]
    tm = _tile(M, tm_target, 16)
    tn = _tile(N, tn_target, 256)
    tk = _tile(K, tk_target, 256)
    nm, nn, nk = M // tm, N // tn, K // tk
    out = pl.pallas_call(
        functools.partial(_cls_xent_kernel, nm=nm, nn=nn, nk=nk, tn=tn),
        grid=(nm, nn, nk),
        in_specs=[pl.BlockSpec((tm, tk), lambda i, j, k: (i, k)),
                  pl.BlockSpec((tk, tn), lambda i, j, k: (k, j)),
                  pl.BlockSpec((1, tn), lambda i, j, k: (0, j)),
                  pl.BlockSpec((tm, 1), lambda i, j, k: (i, 0))],
        out_specs=pl.BlockSpec((1, 1), lambda i, j, k: (0, 0)),
        out_shape=jax.ShapeDtypeStruct((1, 1), jnp.float32),
        scratch_shapes=[pltpu.VMEM((tm, tn), jnp.float32),   # acc
                        pltpu.VMEM((tm, 1), jnp.float32),    # running max
                        pltpu.VMEM((tm, 1), jnp.float32),    # running sum-exp
                        pltpu.VMEM((tm, 1), jnp.float32),    # picked logit
                        pltpu.VMEM((1, 1), jnp.float32),     # total loss
                        pltpu.VMEM((1, 1), jnp.float32)],    # valid count
        compiler_params=pltpu.CompilerParams(
            dimension_semantics=("arbitrary", "arbitrary", "arbitrary"),
            vmem_limit_bytes=VMEM_LIMIT_BYTES),
    )(x, w, b.reshape(1, N).astype(jnp.float32),
      labels.reshape(M, 1).astype(jnp.int32))
    return out[0, 0]


# ---------------------------- softmax (row-tiled) ------------------------------

def _softmax_kernel(x_ref, o_ref):
    x = x_ref[...].astype(jnp.float32)
    mx = jnp.max(x, axis=-1, keepdims=True)
    e = jnp.exp(x - mx)
    o_ref[...] = e * pl.reciprocal(jnp.sum(e, axis=-1, keepdims=True), approx=False)


def softmax_rows(x):
    M, Vp = x.shape
    # bound (tm, Vp) f32 blocks by ~2 MB so real vocab sizes fit scoped VMEM
    tm_target = max(16, min(512, ((2 << 20) // max(Vp * 4, 1)) // 16 * 16))
    tm = _tile(M, tm_target, 16)
    return pl.pallas_call(
        _softmax_kernel,
        grid=(M // tm,),
        in_specs=[pl.BlockSpec((tm, Vp), lambda i: (i, 0))],
        out_specs=pl.BlockSpec((tm, Vp), lambda i: (i, 0)),
        out_shape=jax.ShapeDtypeStruct((M, Vp), jnp.float32),
        compiler_params=pltpu.CompilerParams(
            dimension_semantics=("parallel",),
            vmem_limit_bytes=VMEM_LIMIT_BYTES),
    )(x)


# ------------------------------ model glue -------------------------------------

def init_params(key, *, vocab_size, hidden, n_layers, n_heads, intermediate,
                max_pos):
    keys = jax.random.split(key, 4 + n_layers)
    norm = lambda k, s: jax.random.normal(k, s, jnp.float32) * 0.02
    params = dict(hidden=hidden, n_heads=n_heads, vocab_size=vocab_size)
    params["word_emb"] = norm(keys[0], (vocab_size, hidden))
    params["pos_emb"] = norm(keys[1], (max_pos, hidden))
    params["type_emb"] = norm(keys[2], (2, hidden))
    params["emb_ln_g"] = jnp.ones((hidden,), jnp.float32)
    params["emb_ln_b"] = jnp.zeros((hidden,), jnp.float32)
    layers = []
    for li in range(n_layers):
        lk = jax.random.split(keys[4 + li], 4)
        layers.append(dict(
            w_qkv=norm(lk[0], (hidden, 3 * hidden)).astype(jnp.bfloat16),
            b_qkv=jnp.zeros((3 * hidden,), jnp.float32),
            wo=norm(lk[1], (hidden, hidden)).astype(jnp.bfloat16),
            bo=jnp.zeros((hidden,), jnp.float32),
            ln1_g=jnp.ones((hidden,), jnp.float32),
            ln1_b=jnp.zeros((hidden,), jnp.float32),
            wi=norm(lk[2], (hidden, intermediate)).astype(jnp.bfloat16),
            bi=jnp.zeros((intermediate,), jnp.float32),
            wf=norm(lk[3], (intermediate, hidden)).astype(jnp.bfloat16),
            bf=jnp.zeros((hidden,), jnp.float32),
            ln2_g=jnp.ones((hidden,), jnp.float32),
            ln2_b=jnp.zeros((hidden,), jnp.float32),
        ))
    params["layers"] = layers
    # classifier: pad vocab to a multiple of 512 (pad weights 0, pad bias -1e30
    # so padded columns contribute exp()=0 to softmax / logsumexp).
    v_pad = _round_up(vocab_size, 512)
    cls_w = norm(keys[3], (hidden, vocab_size))
    params["cls_w"] = jnp.pad(
        cls_w, ((0, 0), (0, v_pad - vocab_size))).astype(jnp.bfloat16)
    params["cls_b"] = jnp.pad(jnp.zeros((vocab_size,), jnp.float32),
                              (0, v_pad - vocab_size), constant_values=-1e30)
    params["v_pad"] = v_pad
    return params


def bert_encode(params, x_ids, attn_mask):
    B, S = x_ids.shape
    H = params["hidden"]
    nH = params["n_heads"]
    dh = H // nH

    # TODO(synk): embedding gather stays in XLA (no simple Pallas equivalent).
    emb = (params["word_emb"][x_ids]
           + params["pos_emb"][:S][None, :, :]
           + params["type_emb"][0][None, None, :])
    h = layernorm(emb.reshape(B * S, H),
                  params["emb_ln_g"], params["emb_ln_b"])          # (B*S, H) bf16

    ext = ((1.0 - attn_mask.astype(jnp.float32)) * -10000.0)[:, None, :]  # (B,1,S)
    scale = 1.0 / math.sqrt(dh)

    for layer in params["layers"]:
        qkv = linear(h, layer["w_qkv"], layer["b_qkv"])            # (B*S, 3H) bf16
        ctx = attention(qkv.reshape(B, S, 3 * H), ext,
                        n_heads=nH, head_dim=dh, scale=scale)      # (B, S, H) bf16
        h = linear_residual_ln(ctx.reshape(B * S, H), layer["wo"], layer["bo"],
                               h, layer["ln1_g"], layer["ln1_b"])
        inter = linear(h, layer["wi"], layer["bi"], activation="gelu")
        h = linear_residual_ln(inter, layer["wf"], layer["bf"],
                               h, layer["ln2_g"], layer["ln2_b"])
    return h                                                       # (B*S, H) bf16


def language_model_forward(params, x, y=None, mask=None):
    B, S = x.shape
    V = params["vocab_size"]
    if y is not None:
        m = mask if mask is not None else jnp.ones((B, S), jnp.float32)
        h = bert_encode(params, x, m)
        # fused classifier + cross-entropy: (M, V) logits never hit HBM
        return classifier_cross_entropy(h, params["cls_w"], params["cls_b"],
                                        y.reshape(-1))
    else:
        h = bert_encode(params, x, jnp.ones((B, S), jnp.float32))
        logits = linear(h, params["cls_w"], params["cls_b"],
                        out_dtype=jnp.bfloat16, tm_target=512)     # (M, Vpad) bf16
        probs = softmax_rows(logits)                               # (M, Vpad) f32
        return probs[:, :V].reshape(B, S, V)


# --------------------------------- driver --------------------------------------

if __name__ == "__main__":
    # Small but tile-friendly shapes so the pipelined / lane-dense paths are
    # actually exercised: 2 heads x 64-dim => 128-lane attention stores,
    # V=1000 -> padded to 1024 (exercises the vocab-padding path).
    B, S, H, V = 2, 128, 128, 1000
    n_layers, n_heads, inter = 2, 2, 512

    key = jax.random.PRNGKey(0)
    kp, kx, ky = jax.random.split(key, 3)

    params = init_params(kp, vocab_size=V, hidden=H, n_layers=n_layers,
                         n_heads=n_heads, intermediate=inter, max_pos=S)

    x = jax.random.randint(kx, (B, S), 0, V, dtype=jnp.int32)
    y = jax.random.randint(ky, (B, S), 0, V, dtype=jnp.int32)
    y = y.at[:, 0].set(-1)                        # exercise ignore_index=-1
    mask = jnp.ones((B, S), jnp.float32).at[1, -16:].set(0.0)

    loss = language_model_forward(params, x, y=y, mask=mask)   # training branch
    probs = language_model_forward(params, x)                  # inference branch
    jax.block_until_ready((loss, probs))

    assert loss.shape == () and bool(jnp.isfinite(loss))
    assert probs.shape == (B, S, V)
    assert bool(jnp.allclose(jnp.sum(probs, axis=-1), 1.0, atol=1e-4))
    print("KERNEL_OK")
</pallas_src>

<mosaic_0001>
module attributes {stable_mosaic.version = 11 : i64} {
  func.func @_layernorm_kernel(%arg0: i32, %arg1: memref<256x128xf32, #tpu.memory_space<vmem>>, %arg2: memref<1x128xf32, #tpu.memory_space<vmem>>, %arg3: memref<1x128xf32, #tpu.memory_space<vmem>>, %arg4: memref<256x128xbf16, #tpu.memory_space<vmem>>) attributes {dimension_semantics = [#tpu.dimension_semantics<parallel>], iteration_bounds = array<i64: 1>, scalar_prefetch = 0 : i64, scratch_operands = 0 : i64, tpu.core_type = #tpu.core_type<tc>, window_params = [{transform_indices = @transform_0, window_bounds = array<i64: 256, 128>}, {pipeline_mode = #tpu.pipeline_mode<synchronous>, transform_indices = @transform_1, window_bounds = array<i64: 1, 128>}, {pipeline_mode = #tpu.pipeline_mode<synchronous>, transform_indices = @transform_2, window_bounds = array<i64: 1, 128>}, {transform_indices = @transform_3, window_bounds = array<i64: 256, 128>}]} {
    %c0 = arith.constant 0 : index
    %c0_0 = arith.constant 0 : index
    %0 = vector.load %arg1[%c0, %c0_0] : memref<256x128xf32, #tpu.memory_space<vmem>>, vector<256x128xf32>
    %cst = arith.constant dense<0.000000e+00> : vector<256xf32>
    %1 = vector.multi_reduction <add>, %0, %cst [1] : vector<256x128xf32> to vector<256xf32>
    %2 = vector.shape_cast %1 : vector<256xf32> to vector<256x1xf32>
    %cst_1 = arith.constant 1.280000e+02 : f32
    %3 = vector.broadcast %cst_1 : f32 to vector<256x1xf32>
    %4 = arith.divf %2, %3 : vector<256x1xf32>
    %5 = vector.broadcast %4 : vector<256x1xf32> to vector<256x128xf32>
    %6 = arith.subf %0, %5 : vector<256x128xf32>
    %7 = arith.mulf %6, %6 : vector<256x128xf32>
    %cst_2 = arith.constant dense<0.000000e+00> : vector<256xf32>
    %8 = vector.multi_reduction <add>, %7, %cst_2 [1] : vector<256x128xf32> to vector<256xf32>
    %9 = vector.shape_cast %8 : vector<256xf32> to vector<256x1xf32>
    %cst_3 = arith.constant 1.280000e+02 : f32
    %10 = vector.broadcast %cst_3 : f32 to vector<256x1xf32>
    %11 = arith.divf %9, %10 : vector<256x1xf32>
    %cst_4 = arith.constant 9.99999996E-13 : f32
    %12 = vector.broadcast %cst_4 : f32 to vector<256x1xf32>
    %13 = arith.addf %11, %12 : vector<256x1xf32>
    %14 = math.rsqrt %13 : vector<256x1xf32>
    %15 = vector.broadcast %14 : vector<256x1xf32> to vector<256x128xf32>
    %16 = arith.mulf %6, %15 : vector<256x128xf32>
    %c0_5 = arith.constant 0 : index
    %c0_6 = arith.constant 0 : index
    %17 = vector.load %arg2[%c0_5, %c0_6] : memref<1x128xf32, #tpu.memory_space<vmem>>, vector<1x128xf32>
    %18 = vector.broadcast %17 : vector<1x128xf32> to vector<256x128xf32>
    %19 = arith.mulf %16, %18 : vector<256x128xf32>
    %c0_7 = arith.constant 0 : index
    %c0_8 = arith.constant 0 : index
    %20 = vector.load %arg3[%c0_7, %c0_8] : memref<1x128xf32, #tpu.memory_space<vmem>>, vector<1x128xf32>
    %21 = vector.broadcast %20 : vector<1x128xf32> to vector<256x128xf32>
    %22 = arith.addf %19, %21 : vector<256x128xf32>
    %23 = arith.truncf %22 : vector<256x128xf32> to vector<256x128xbf16>
    %c0_9 = arith.constant 0 : index
    %c0_10 = arith.constant 0 : index
    %24 = vector.load %arg4[%c0_9, %c0_10] : memref<256x128xbf16, #tpu.memory_space<vmem>>, vector<256x128xbf16>
    tpu.vector_store %arg4[%c0_9, %c0_10], %23 {strides = array<i32>} : memref<256x128xbf16, #tpu.memory_space<vmem>>, vector<256x128xbf16>,
    return
  }
  func.func @transform_0(%arg0: i32) -> (i32, i32) {
    %c0_i32 = arith.constant 0 : i32
    %c0_i32_0 = arith.constant 0 : i32
    return %arg0, %c0_i32 : i32, i32
  }
  func.func @transform_1(%arg0: i32) -> (i32, i32) {
    %c0_i32 = arith.constant 0 : i32
    %c0_i32_0 = arith.constant 0 : i32
    %c0_i32_1 = arith.constant 0 : i32
    return %c0_i32, %c0_i32_0 : i32, i32
  }
  func.func @transform_2(%arg0: i32) -> (i32, i32) {
    %c0_i32 = arith.constant 0 : i32
    %c0_i32_0 = arith.constant 0 : i32
    %c0_i32_1 = arith.constant 0 : i32
    return %c0_i32, %c0_i32_0 : i32, i32
  }
  func.func @transform_3(%arg0: i32) -> (i32, i32) {
    %c0_i32 = arith.constant 0 : i32
    %c0_i32_0 = arith.constant 0 : i32
    return %arg0, %c0_i32 : i32, i32
  }
}

</mosaic_0001>

<llo_original>
// kernel: tpu_custom_call.1
$region0: #{tpu_custom_call.1}
  #allocation0 [shape = 'u32[]', space=smem, size = 0x4, offset = 0x4, fixed_abs, tag = 'smem constant byte address 0x4 - core index']
  #allocation1 [shape = 'u32[144,128]{1,0:T(1,128)}', space=vmem, size = 0x12000, scoped, tag = 'internal scratch']
  %s0 = inlined_call_operand.hbm [shape: f32[256,128], index: 0, kind: input, shape index: {}]
  %s1 = inlined_call_operand.vmem [shape: f32[1,128], index: 1, kind: input, shape index: {}]
  %s2 = inlined_call_operand.vmem [shape: f32[1,128], index: 2, kind: input, shape index: {}]
  %s3 = inlined_call_operand.hbm [shape: bf16[256,128], index: 3, kind: output, shape index: {}]
  %s4 = sld [smem:[#allocation0]]
  $region26: #{tpu_custom_call.1} parent=0
    _
  %s6 = ssub.s32 1, %s4
  %s7 = scalar_select 0, %s6, %s4
  $region1: #{tpu_custom_call.1} parent=0
    #allocation2 [shape = 'u8[131072]{0}', space=vmem, size = 0x20000, scoped, tag = 'input window, operand 0, single buffered']
    #allocation3 [shape = 's32[1]{0}', space=sflag, size = 0x4, scoped, tag = 'scoped memory for tpu_custom_call.1']
    #allocation4 [shape = 's32[1]{0}', space=sflag, size = 0x4, scoped, tag = 'scoped memory for tpu_custom_call.1']
    #allocation5 [shape = 'u8[65536]{0}', space=vmem, size = 0x10000, scoped, tag = 'output window, operand 0, single buffered']
    %8 = vsyncpa [#allocation3], 0
    %9 = vsyncpa [#allocation4], 0
    // Predicated region
    $region2: #{tpu_custom_call.1} parent=1 // pred_check
      _
    $region3: #{tpu_custom_call.1} parent=1 // pred_check_branch
      %11 = sbr.rel (0) target = $region5
    $region4: #{tpu_custom_call.1} parent=1 // pred_region
      %s13 = ssub.s32 4096, 4096
      %14 = vsyncadd [#allocation3], %s13
      %s15 = sshll.u32 [#allocation2], 4
      %s16 = int_to_ptr.vmem [resolvable:$true] %s15
      %21 = dma.hbm_to_vmem [thread:$0]  %s0, 4096, %s16, [#allocation3], 128, 128, 8
    $region5: #{tpu_custom_call.1} parent=1 // pred_fallthru
      _
    // Predicated region
    $region6: #{tpu_custom_call.1} parent=1 // pred_check
      _
    $region7: #{tpu_custom_call.1} parent=1 // pred_check_branch
      %23 = sbr.rel (0) target = $region9
    $region8: #{tpu_custom_call.1} parent=1 // pred_region
      _
    $region9: #{tpu_custom_call.1} parent=1 // pred_fallthru
      _
    // Predicated region
    $region10: #{tpu_custom_call.1} parent=1 // pred_check
      _
    $region11: #{tpu_custom_call.1} parent=1 // pred_check_branch
      %25 = sbr.rel (0) target = $region13
    $region12: #{tpu_custom_call.1} parent=1 // pred_region
      _
    $region13: #{tpu_custom_call.1} parent=1 // pred_fallthru
      _
    // Predicated region
    $region14: #{tpu_custom_call.1} parent=1 // pred_check
      _
    $region15: #{tpu_custom_call.1} parent=1 // pred_check_branch
      %27 = sbr.rel (0) target = $region17
    $region16: #{tpu_custom_call.1} parent=1 // pred_region
      %28 = dma.done [#allocation3], 4096
    $region17: #{tpu_custom_call.1} parent=1 // pred_fallthru
      _
    %v29 = vld [vmem:[#allocation2] sm:$0xff]
    %v30 = vld [vmem:[#allocation2 + $0x8] sm:$0xff]
    %v31 = vld [vmem:[#allocation2 + $0x10] sm:$0xff]
    %v32 = vld [vmem:[#allocation2 + $0x18] sm:$0xff]
    %v33 = vld [vmem:[#allocation2 + $0x20] sm:$0xff]
    %v34 = vld [vmem:[#allocation2 + $0x28] sm:$0xff]
    %v35 = vld [vmem:[#allocation2 + $0x30] sm:$0xff]
    %v36 = vld [vmem:[#allocation2 + $0x38] sm:$0xff]
    %v37 = vld [vmem:[#allocation2 + $0x40] sm:$0xff]
    %v38 = vld [vmem:[#allocation2 + $0x48] sm:$0xff]
    %v39 = vld [vmem:[#allocation2 + $0x50] sm:$0xff]
    %v40 = vld [vmem:[#allocation2 + $0x58] sm:$0xff]
    %v41 = vld [vmem:[#allocation2 + $0x60] sm:$0xff]
    %v42 = vld [vmem:[#allocation2 + $0x68] sm:$0xff]
    %v43 = vld [vmem:[#allocation2 + $0x70] sm:$0xff]
    %v44 = vld [vmem:[#allocation2 + $0x78] sm:$0xff]
    %v45 = vld [vmem:[#allocation2 + $0x80] sm:$0xff]
    %v46 = vld [vmem:[#allocation2 + $0x88] sm:$0xff]
    %v47 = vld [vmem:[#allocation2 + $0x90] sm:$0xff]
    %v48 = vld [vmem:[#allocation2 + $0x98] sm:$0xff]
    %v49 = vld [vmem:[#allocation2 + $0xa0] sm:$0xff]
    %v50 = vld [vmem:[#allocation2 + $0xa8] sm:$0xff]
    %v51 = vld [vmem:[#allocation2 + $0xb0] sm:$0xff]
    %v52 = vld [vmem:[#allocation2 + $0xb8] sm:$0xff]
    %v53 = vld [vmem:[#allocation2 + $0xc0] sm:$0xff]
    %v54 = vld [vmem:[#allocation2 + $0xc8] sm:$0xff]
    %v55 = vld [vmem:[#allocation2 + $0xd0] sm:$0xff]
    %v56 = vld [vmem:[#allocation2 + $0xd8] sm:$0xff]
    %v57 = vld [vmem:[#allocation2 + $0xe0] sm:$0xff]
    %v58 = vld [vmem:[#allocation2 + $0xe8] sm:$0xff]
    %v59 = vld [vmem:[#allocation2 + $0xf0] sm:$0xff]
    %v60 = vld [vmem:[#allocation2 + $0xf8] sm:$0xff]
    %61 = vadd.xlane.f32.xlu0 %v29
    %v62 = vpop.xlane.xlu0 %61
    %63 = vadd.xlane.f32.xlu0 %v30
    %v64 = vpop.xlane.xlu0 %63
    %65 = vadd.xlane.f32.xlu0 %v31
    %v66 = vpop.xlane.xlu0 %65
    %67 = vadd.xlane.f32.xlu0 %v32
    %v68 = vpop.xlane.xlu0 %67
    %69 = vadd.xlane.f32.xlu0 %v33
    %v70 = vpop.xlane.xlu0 %69
    %71 = vadd.xlane.f32.xlu0 %v34
    %v72 = vpop.xlane.xlu0 %71
    %73 = vadd.xlane.f32.xlu0 %v35
    %v74 = vpop.xlane.xlu0 %73
    %75 = vadd.xlane.f32.xlu0 %v36
    %v76 = vpop.xlane.xlu0 %75
    %77 = vadd.xlane.f32.xlu0 %v37
    %v78 = vpop.xlane.xlu0 %77
    %79 = vadd.xlane.f32.xlu0 %v38
    %v80 = vpop.xlane.xlu0 %79
    %81 = vadd.xlane.f32.xlu0 %v39
    %v82 = vpop.xlane.xlu0 %81
    %83 = vadd.xlane.f32.xlu0 %v40
    %v84 = vpop.xlane.xlu0 %83
    %85 = vadd.xlane.f32.xlu0 %v41
    %v86 = vpop.xlane.xlu0 %85
    %87 = vadd.xlane.f32.xlu0 %v42
    %v88 = vpop.xlane.xlu0 %87
    %89 = vadd.xlane.f32.xlu0 %v43
    %v90 = vpop.xlane.xlu0 %89
    %91 = vadd.xlane.f32.xlu0 %v44
    %v92 = vpop.xlane.xlu0 %91
    %93 = vadd.xlane.f32.xlu0 %v45
    %v94 = vpop.xlane.xlu0 %93
    %95 = vadd.xlane.f32.xlu0 %v46
    %v96 = vpop.xlane.xlu0 %95
    %97 = vadd.xlane.f32.xlu0 %v47
    %v98 = vpop.xlane.xlu0 %97
    %99 = vadd.xlane.f32.xlu0 %v48
    %v100 = vpop.xlane.xlu0 %99
    %101 = vadd.xlane.f32.xlu0 %v49
    %v102 = vpop.xlane.xlu0 %101
    %103 = vadd.xlane.f32.xlu0 %v50
    %v104 = vpop.xlane.xlu0 %103
    %105 = vadd.xlane.f32.xlu0 %v51
    %v106 = vpop.xlane.xlu0 %105
    %107 = vadd.xlane.f32.xlu0 %v52
    %v108 = vpop.xlane.xlu0 %107
    %109 = vadd.xlane.f32.xlu0 %v53
    %v110 = vpop.xlane.xlu0 %109
    %111 = vadd.xlane.f32.xlu0 %v54
    %v112 = vpop.xlane.xlu0 %111
    %113 = vadd.xlane.f32.xlu0 %v55
    %v114 = vpop.xlane.xlu0 %113
    %115 = vadd.xlane.f32.xlu0 %v56
    %v116 = vpop.xlane.xlu0 %115
    %117 = vadd.xlane.f32.xlu0 %v57
    %v118 = vpop.xlane.xlu0 %117
    %119 = vadd.xlane.f32.xlu0 %v58
    %v120 = vpop.xlane.xlu0 %119
    %121 = vadd.xlane.f32.xlu0 %v59
    %v122 = vpop.xlane.xlu0 %121
    %123 = vadd.xlane.f32.xlu0 %v60
    %v124 = vpop.xlane.xlu0 %123
    %v125 = vrcp.pop 128.0
    %v126 = vmul.f32 %v62, %v125
    %v127 = vmul.f32 %v64, %v125
    %v128 = vmul.f32 %v66, %v125
    %v129 = vmul.f32 %v68, %v125
    %v130 = vmul.f32 %v70, %v125
    %v131 = vmul.f32 %v72, %v125
    %v132 = vmul.f32 %v74, %v125
    %v133 = vmul.f32 %v76, %v125
    %v134 = vmul.f32 %v78, %v125
    %v135 = vmul.f32 %v80, %v125
    %v136 = vmul.f32 %v82, %v125
    %v137 = vmul.f32 %v84, %v125
    %v138 = vmul.f32 %v86, %v125
    %v139 = vmul.f32 %v88, %v125
    %v140 = vmul.f32 %v90, %v125
    %v141 = vmul.f32 %v92, %v125
    %v142 = vmul.f32 %v94, %v125
    %v143 = vmul.f32 %v96, %v125
    %v144 = vmul.f32 %v98, %v125
    %v145 = vmul.f32 %v100, %v125
    %v146 = vmul.f32 %v102, %v125
    %v147 = vmul.f32 %v104, %v125
    %v148 = vmul.f32 %v106, %v125
    %v149 = vmul.f32 %v108, %v125
    %v150 = vmul.f32 %v110, %v125
    %v151 = vmul.f32 %v112, %v125
    %v152 = vmul.f32 %v114, %v125
    %v153 = vmul.f32 %v116, %v125
    %v154 = vmul.f32 %v118, %v125
    %v155 = vmul.f32 %v120, %v125
    %v156 = vmul.f32 %v122, %v125
    %v157 = vmul.f32 %v124, %v125
    %v158 = vsub.f32 %v29, %v126
    %v159 = vsub.f32 %v30, %v127
    %v160 = vsub.f32 %v31, %v128
    %v161 = vsub.f32 %v32, %v129
    %v162 = vsub.f32 %v33, %v130
    %v163 = vsub.f32 %v34, %v131
    %v164 = vsub.f32 %v35, %v132
    %v165 = vsub.f32 %v36, %v133
    %v166 = vsub.f32 %v37, %v134
    %v167 = vsub.f32 %v38, %v135
    %v168 = vsub.f32 %v39, %v136
    %v169 = vsub.f32 %v40, %v137
    %v170 = vsub.f32 %v41, %v138
    %v171 = vsub.f32 %v42, %v139
    %v172 = vsub.f32 %v43, %v140
    %v173 = vsub.f32 %v44, %v141
    %v174 = vsub.f32 %v45, %v142
    %v175 = vsub.f32 %v46, %v143
    %v176 = vsub.f32 %v47, %v144
    %v177 = vsub.f32 %v48, %v145
    %v178 = vsub.f32 %v49, %v146
    %v179 = vsub.f32 %v50, %v147
    %v180 = vsub.f32 %v51, %v148
    %v181 = vsub.f32 %v52, %v149
    %v182 = vsub.f32 %v53, %v150
    %v183 = vsub.f32 %v54, %v151
    %v184 = vsub.f32 %v55, %v152
    %v185 = vsub.f32 %v56, %v153
    %v186 = vsub.f32 %v57, %v154
    %v187 = vsub.f32 %v58, %v155
    %v188 = vsub.f32 %v59, %v156
    %v189 = vsub.f32 %v60, %v157
    %v190 = vmul.f32 %v158, %v158
    %v191 = vmul.f32 %v159, %v159
    %v192 = vmul.f32 %v160, %v160
    %v193 = vmul.f32 %v161, %v161
    %v194 = vmul.f32 %v162, %v162
    %v195 = vmul.f32 %v163, %v163
    %v196 = vmul.f32 %v164, %v164
    %v197 = vmul.f32 %v165, %v165
    %v198 = vmul.f32 %v166, %v166
    %v199 = vmul.f32 %v167, %v167
    %v200 = vmul.f32 %v168, %v168
    %v201 = vmul.f32 %v169, %v169
    %v202 = vmul.f32 %v170, %v170
    %v203 = vmul.f32 %v171, %v171
    %v204 = vmul.f32 %v172, %v172
    %v205 = vmul.f32 %v173, %v173
    %v206 = vmul.f32 %v174, %v174
    %v207 = vmul.f32 %v175, %v175
    %v208 = vmul.f32 %v176, %v176
    %v209 = vmul.f32 %v177, %v177
    %v210 = vmul.f32 %v178, %v178
    %v211 = vmul.f32 %v179, %v179
    %v212 = vmul.f32 %v180, %v180
    %v213 = vmul.f32 %v181, %v181
    %v214 = vmul.f32 %v182, %v182
    %v215 = vmul.f32 %v183, %v183
    %v216 = vmul.f32 %v184, %v184
    %v217 = vmul.f32 %v185, %v185
    %v218 = vmul.f32 %v186, %v186
    %v219 = vmul.f32 %v187, %v187
    %v220 = vmul.f32 %v188, %v188
    %v221 = vmul.f32 %v189, %v189
    %222 = vadd.xlane.f32.xlu0 %v190
    %v223 = vpop.xlane.xlu0 %222
    %224 = vadd.xlane.f32.xlu0 %v191
    %v225 = vpop.xlane.xlu0 %224
    %226 = vadd.xlane.f32.xlu0 %v192
    %v227 = vpop.xlane.xlu0 %226
    %228 = vadd.xlane.f32.xlu0 %v193
    %v229 = vpop.xlane.xlu0 %228
    %230 = vadd.xlane.f32.xlu0 %v194
    %v231 = vpop.xlane.xlu0 %230
    %232 = vadd.xlane.f32.xlu0 %v195
    %v233 = vpop.xlane.xlu0 %232
    %234 = vadd.xlane.f32.xlu0 %v196
    %v235 = vpop.xlane.xlu0 %234
    %236 = vadd.xlane.f32.xlu0 %v197
    %v237 = vpop.xlane.xlu0 %236
    %238 = vadd.xlane.f32.xlu0 %v198
    %v239 = vpop.xlane.xlu0 %238
    %240 = vadd.xlane.f32.xlu0 %v199
    %v241 = vpop.xlane.xlu0 %240
    %242 = vadd.xlane.f32.xlu0 %v200
    %v243 = vpop.xlane.xlu0 %242
    %244 = vadd.xlane.f32.xlu0 %v201
    %v245 = vpop.xlane.xlu0 %244
    %246 = vadd.xlane.f32.xlu0 %v202
    %v247 = vpop.xlane.xlu0 %246
    %248 = vadd.xlane.f32.xlu0 %v203
    %v249 = vpop.xlane.xlu0 %248
    %250 = vadd.xlane.f32.xlu0 %v204
    %v251 = vpop.xlane.xlu0 %250
    %252 = vadd.xlane.f32.xlu0 %v205
    %v253 = vpop.xlane.xlu0 %252
    %254 = vadd.xlane.f32.xlu0 %v206
    %v255 = vpop.xlane.xlu0 %254
    %256 = vadd.xlane.f32.xlu0 %v207
    %v257 = vpop.xlane.xlu0 %256
    %258 = vadd.xlane.f32.xlu0 %v208
    %v259 = vpop.xlane.xlu0 %258
    %260 = vadd.xlane.f32.xlu0 %v209
    %v261 = vpop.xlane.xlu0 %260
    %262 = vadd.xlane.f32.xlu0 %v210
    %v263 = vpop.xlane.xlu0 %262
    %264 = vadd.xlane.f32.xlu0 %v211
    %v265 = vpop.xlane.xlu0 %264
    %266 = vadd.xlane.f32.xlu0 %v212
    %v267 = vpop.xlane.xlu0 %266
    %268 = vadd.xlane.f32.xlu0 %v213
    %v269 = vpop.xlane.xlu0 %268
    %270 = vadd.xlane.f32.xlu0 %v214
    %v271 = vpop.xlane.xlu0 %270
    %272 = vadd.xlane.f32.xlu0 %v215
    %v273 = vpop.xlane.xlu0 %272
    %274 = vadd.xlane.f32.xlu0 %v216
    %v275 = vpop.xlane.xlu0 %274
    %276 = vadd.xlane.f32.xlu0 %v217
    %v277 = vpop.xlane.xlu0 %276
    %278 = vadd.xlane.f32.xlu0 %v218
    %v279 = vpop.xlane.xlu0 %278
    %280 = vadd.xlane.f32.xlu0 %v219
    %v281 = vpop.xlane.xlu0 %280
    %282 = vadd.xlane.f32.xlu0 %v220
    %v283 = vpop.xlane.xlu0 %282
    %284 = vadd.xlane.f32.xlu0 %v221
    %v285 = vpop.xlane.xlu0 %284
    %v286 = vmul.f32 %v223, %v125
    %v287 = vmul.f32 %v225, %v125
    %v288 = vmul.f32 %v227, %v125
    %v289 = vmul.f32 %v229, %v125
    %v290 = vmul.f32 %v231, %v125
    %v291 = vmul.f32 %v233, %v125
    %v292 = vmul.f32 %v235, %v125
    %v293 = vmul.f32 %v237, %v125
    %v294 = vmul.f32 %v239, %v125
    %v295 = vmul.f32 %v241, %v125
    %v296 = vmul.f32 %v243, %v125
    %v297 = vmul.f32 %v245, %v125
    %v298 = vmul.f32 %v247, %v125
    %v299 = vmul.f32 %v249, %v125
    %v300 = vmul.f32 %v251, %v125
    %v301 = vmul.f32 %v253, %v125
    %v302 = vmul.f32 %v255, %v125
    %v303 = vmul.f32 %v257, %v125
    %v304 = vmul.f32 %v259, %v125
    %v305 = vmul.f32 %v261, %v125
    %v306 = vmul.f32 %v263, %v125
    %v307 = vmul.f32 %v265, %v125
    %v308 = vmul.f32 %v267, %v125
    %v309 = vmul.f32 %v269, %v125
    %v310 = vmul.f32 %v271, %v125
    %v311 = vmul.f32 %v273, %v125
    %v312 = vmul.f32 %v275, %v125
    %v313 = vmul.f32 %v277, %v125
    %v314 = vmul.f32 %v279, %v125
    %v315 = vmul.f32 %v281, %v125
    %v316 = vmul.f32 %v283, %v125
    %v317 = vmul.f32 %v285, %v125
    %v318 = vadd.f32 %v286, 1e-12
    %v319 = vadd.f32 %v287, 1e-12
    %v320 = vadd.f32 %v288, 1e-12
    %v321 = vadd.f32 %v289, 1e-12
    %v322 = vadd.f32 %v290, 1e-12
    %v323 = vadd.f32 %v291, 1e-12
    %v324 = vadd.f32 %v292, 1e-12
    %v325 = vadd.f32 %v293, 1e-12
    %v326 = vadd.f32 %v294, 1e-12
    %v327 = vadd.f32 %v295, 1e-12
    %v328 = vadd.f32 %v296, 1e-12
    %v329 = vadd.f32 %v297, 1e-12
    %v330 = vadd.f32 %v298, 1e-12
    %v331 = vadd.f32 %v299, 1e-12
    %v332 = vadd.f32 %v300, 1e-12
    %v333 = vadd.f32 %v301, 1e-12
    %v334 = vadd.f32 %v302, 1e-12
    %v335 = vadd.f32 %v303, 1e-12
    %v336 = vadd.f32 %v304, 1e-12
    %v337 = vadd.f32 %v305, 1e-12
    %v338 = vadd.f32 %v306, 1e-12
    %v339 = vadd.f32 %v307, 1e-12
    %v340 = vadd.f32 %v308, 1e-12
    %v341 = vadd.f32 %v309, 1e-12
    %v342 = vadd.f32 %v310, 1e-12
    %v343 = vadd.f32 %v311, 1e-12
    %v344 = vadd.f32 %v312, 1e-12
    %v345 = vadd.f32 %v313, 1e-12
    %v346 = vadd.f32 %v314, 1e-12
    %v347 = vadd.f32 %v315, 1e-12
    %v348 = vadd.f32 %v316, 1e-12
    %v349 = vadd.f32 %v317, 1e-12
    %v350 = vrsqrt.pop %v318
    %v351 = vrsqrt.pop %v319
    %v352 = vrsqrt.pop %v320
    %v353 = vrsqrt.pop %v321
    %v354 = vrsqrt.pop %v322
    %v355 = vrsqrt.pop %v323
    %v356 = vrsqrt.pop %v324
    %v357 = vrsqrt.pop %v325
    %v358 = vrsqrt.pop %v326
    %v359 = vrsqrt.pop %v327
    %v360 = vrsqrt.pop %v328
    %v361 = vrsqrt.pop %v329
    %v362 = vrsqrt.pop %v330
    %v363 = vrsqrt.pop %v331
    %v364 = vrsqrt.pop %v332
    %v365 = vrsqrt.pop %v333
    %v366 = vrsqrt.pop %v334
    %v367 = vrsqrt.pop %v335
    %v368 = vrsqrt.pop %v336
    %v369 = vrsqrt.pop %v337
    %v370 = vrsqrt.pop %v338
    %v371 = vrsqrt.pop %v339
    %v372 = vrsqrt.pop %v340
    %v373 = vrsqrt.pop %v341
    %v374 = vrsqrt.pop %v342
    %v375 = vrsqrt.pop %v343
    %v376 = vrsqrt.pop %v344
    %v377 = vrsqrt.pop %v345
    %v378 = vrsqrt.pop %v346
    %v379 = vrsqrt.pop %v347
    %v380 = vrsqrt.pop %v348
    %v381 = vrsqrt.pop %v349
    %v382 = vmul.f32 %v158, %v350
    %v383 = vmul.f32 %v159, %v351
    %v384 = vmul.f32 %v160, %v352
    %v385 = vmul.f32 %v161, %v353
    %v386 = vmul.f32 %v162, %v354
    %v387 = vmul.f32 %v163, %v355
    %v388 = vmul.f32 %v164, %v356
    %v389 = vmul.f32 %v165, %v357
    %v390 = vmul.f32 %v166, %v358
    %v391 = vmul.f32 %v167, %v359
    %v392 = vmul.f32 %v168, %v360
    %v393 = vmul.f32 %v169, %v361
    %v394 = vmul.f32 %v170, %v362
    %v395 = vmul.f32 %v171, %v363
    %v396 = vmul.f32 %v172, %v364
    %v397 = vmul.f32 %v173, %v365
    %v398 = vmul.f32 %v174, %v366
    %v399 = vmul.f32 %v175, %v367
    %v400 = vmul.f32 %v176, %v368
    %v401 = vmul.f32 %v177, %v369
    %v402 = vmul.f32 %v178, %v370
    %v403 = vmul.f32 %v179, %v371
    %v404 = vmul.f32 %v180, %v372
    %v405 = vmul.f32 %v181, %v373
    %v406 = vmul.f32 %v182, %v374
    %v407 = vmul.f32 %v183, %v375
    %v408 = vmul.f32 %v184, %v376
    %v409 = vmul.f32 %v185, %v377
    %v410 = vmul.f32 %v186, %v378
    %v411 = vmul.f32 %v187, %v379
    %v412 = vmul.f32 %v188, %v380
    %v413 = vmul.f32 %v189, %v381
    %v414 = vld [vmem:[%s1] sm:$0x1]
    %v416 = vlaneseq
    %v417 = vshrl.u32 %v416, 7
    %v418 = vsub.s32 0, %v417
    %v419 = vrot.slane %v414, %v418
    %v421 = vmul.f32 %v382, %v419
    %v422 = vmul.f32 %v383, %v419
    %v423 = vmul.f32 %v384, %v419
    %v424 = vmul.f32 %v385, %v419
    %v425 = vmul.f32 %v386, %v419
    %v426 = vmul.f32 %v387, %v419
    %v427 = vmul.f32 %v388, %v419
    %v428 = vmul.f32 %v389, %v419
    %v429 = vmul.f32 %v390, %v419
    %v430 = vmul.f32 %v391, %v419
    %v431 = vmul.f32 %v392, %v419
    %v432 = vmul.f32 %v393, %v419
    %v433 = vmul.f32 %v394, %v419
    %v434 = vmul.f32 %v395, %v419
    %v435 = vmul.f32 %v396, %v419
    %v436 = vmul.f32 %v397, %v419
    %v437 = vmul.f32 %v398, %v419
    %v438 = vmul.f32 %v399, %v419
    %v439 = vmul.f32 %v400, %v419
    %v440 = vmul.f32 %v401, %v419
    %v441 = vmul.f32 %v402, %v419
    %v442 = vmul.f32 %v403, %v419
    %v443 = vmul.f32 %v404, %v419
    %v444 = vmul.f32 %v405, %v419
    %v445 = vmul.f32 %v406, %v419
    %v446 = vmul.f32 %v407, %v419
    %v447 = vmul.f32 %v408, %v419
    %v448 = vmul.f32 %v409, %v419
    %v449 = vmul.f32 %v410, %v419
    %v450 = vmul.f32 %v411, %v419
    %v451 = vmul.f32 %v412, %v419
    %v452 = vmul.f32 %v413, %v419
    %v453 = vld [vmem:[%s2] sm:$0x1]
    %v455 = vlaneseq
    %v456 = vshrl.u32 %v455, 7
    %v457 = vsub.s32 0, %v456
    %v458 = vrot.slane %v453, %v457
    %v460 = vadd.f32 %v421, %v458
    %v461 = vadd.f32 %v422, %v458
    %v462 = vadd.f32 %v423, %v458
    %v463 = vadd.f32 %v424, %v458
    %v464 = vadd.f32 %v425, %v458
    %v465 = vadd.f32 %v426, %v458
    %v466 = vadd.f32 %v427, %v458
    %v467 = vadd.f32 %v428, %v458
    %v468 = vadd.f32 %v429, %v458
    %v469 = vadd.f32 %v430, %v458
    %v470 = vadd.f32 %v431, %v458
    %v471 = vadd.f32 %v432, %v458
    %v472 = vadd.f32 %v433, %v458
    %v473 = vadd.f32 %v434, %v458
    %v474 = vadd.f32 %v435, %v458
    %v475 = vadd.f32 %v436, %v458
    %v476 = vadd.f32 %v437, %v458
    %v477 = vadd.f32 %v438, %v458
    %v478 = vadd.f32 %v439, %v458
    %v479 = vadd.f32 %v440, %v458
    %v480 = vadd.f32 %v441, %v458
    %v481 = vadd.f32 %v442, %v458
    %v482 = vadd.f32 %v443, %v458
    %v483 = vadd.f32 %v444, %v458
    %v484 = vadd.f32 %v445, %v458
    %v485 = vadd.f32 %v446, %v458
    %v486 = vadd.f32 %v447, %v458
    %v487 = vadd.f32 %v448, %v458
    %v488 = vadd.f32 %v449, %v458
    %v489 = vadd.f32 %v450, %v458
    %v490 = vadd.f32 %v451, %v458
    %v491 = vadd.f32 %v452, %v458
    %v492 = vpack.c.bf16 %v461, %v460
    %v493 = vpack.c.bf16 %v463, %v462
    %v494 = vpack.c.bf16 %v465, %v464
    %v495 = vpack.c.bf16 %v467, %v466
    %v496 = vpack.c.bf16 %v469, %v468
    %v497 = vpack.c.bf16 %v471, %v470
    %v498 = vpack.c.bf16 %v473, %v472
    %v499 = vpack.c.bf16 %v475, %v474
    %v500 = vpack.c.bf16 %v477, %v476
    %v501 = vpack.c.bf16 %v479, %v478
    %v502 = vpack.c.bf16 %v481, %v480
    %v503 = vpack.c.bf16 %v483, %v482
    %v504 = vpack.c.bf16 %v485, %v484
    %v505 = vpack.c.bf16 %v487, %v486
    %v506 = vpack.c.bf16 %v489, %v488
    %v507 = vpack.c.bf16 %v491, %v490
    %v524 = vunpack.c.l.b16 %v492
    %v525 = vunpack.c.h.b16 %v492
    %v526 = vunpack.c.l.b16 %v493
    %v527 = vunpack.c.h.b16 %v493
    %v528 = vunpack.c.l.b16 %v494
    %v529 = vunpack.c.h.b16 %v494
    %v530 = vunpack.c.l.b16 %v495
    %v531 = vunpack.c.h.b16 %v495
    %v532 = vunpack.c.l.b16 %v496
    %v533 = vunpack.c.h.b16 %v496
    %v534 = vunpack.c.l.b16 %v497
    %v535 = vunpack.c.h.b16 %v497
    %v536 = vunpack.c.l.b16 %v498
    %v537 = vunpack.c.h.b16 %v498
    %v538 = vunpack.c.l.b16 %v499
    %v539 = vunpack.c.h.b16 %v499
    %v540 = vunpack.c.l.b16 %v500
    %v541 = vunpack.c.h.b16 %v500
    %v542 = vunpack.c.l.b16 %v501
    %v543 = vunpack.c.h.b16 %v501
    %v544 = vunpack.c.l.b16 %v502
    %v545 = vunpack.c.h.b16 %v502
    %v546 = vunpack.c.l.b16 %v503
    %v547 = vunpack.c.h.b16 %v503
    %v548 = vunpack.c.l.b16 %v504
    %v549 = vunpack.c.h.b16 %v504
    %v550 = vunpack.c.l.b16 %v505
    %v551 = vunpack.c.h.b16 %v505
    %v552 = vunpack.c.l.b16 %v506
    %v553 = vunpack.c.h.b16 %v506
    %v554 = vunpack.c.l.b16 %v507
    %v555 = vunpack.c.h.b16 %v507
    %v556 = vpack.c.b16 %v524, %v524
    %v557 = vpack.c.b16 %v525, %v525
    %v558 = vpack.c.b16 %v526, %v526
    %v559 = vpack.c.b16 %v527, %v527
    %v560 = vpack.c.b16 %v528, %v528
    %v561 = vpack.c.b16 %v529, %v529
    %v562 = vpack.c.b16 %v530, %v530
    %v563 = vpack.c.b16 %v531, %v531
    %v564 = vpack.c.b16 %v532, %v532
    %v565 = vpack.c.b16 %v533, %v533
    %v566 = vpack.c.b16 %v534, %v534
    %v567 = vpack.c.b16 %v535, %v535
    %v568 = vpack.c.b16 %v536, %v536
    %v569 = vpack.c.b16 %v537, %v537
    %v570 = vpack.c.b16 %v538, %v538
    %v571 = vpack.c.b16 %v539, %v539
    %v572 = vpack.c.b16 %v540, %v540
    %v573 = vpack.c.b16 %v541, %v541
    %v574 = vpack.c.b16 %v542, %v542
    %v575 = vpack.c.b16 %v543, %v543
    %v576 = vpack.c.b16 %v544, %v544
    %v577 = vpack.c.b16 %v545, %v545
    %v578 = vpack.c.b16 %v546, %v546
    %v579 = vpack.c.b16 %v547, %v547
    %v580 = vpack.c.b16 %v548, %v548
    %v581 = vpack.c.b16 %v549, %v549
    %v582 = vpack.c.b16 %v550, %v550
    %v583 = vpack.c.b16 %v551, %v551
    %v584 = vpack.c.b16 %v552, %v552
    %v585 = vpack.c.b16 %v553, %v553
    %v586 = vpack.c.b16 %v554, %v554
    %v587 = vpack.c.b16 %v555, %v555
    %620 = vst [vmem:[#allocation5] sm:$0xf] %v556
    %621 = vst [vmem:[#allocation5 + $0x4] sm:$0xf] %v557
    %622 = vst [vmem:[#allocation5 + $0x8] sm:$0xf] %v558
    %623 = vst [vmem:[#allocation5 + $0xc] sm:$0xf] %v559
    %624 = vst [vmem:[#allocation5 + $0x10] sm:$0xf] %v560
    %625 = vst [vmem:[#allocation5 + $0x14] sm:$0xf] %v561
    %626 = vst [vmem:[#allocation5 + $0x18] sm:$0xf] %v562
    %627 = vst [vmem:[#allocation5 + $0x1c] sm:$0xf] %v563
    %628 = vst [vmem:[#allocation5 + $0x20] sm:$0xf] %v564
    %629 = vst [vmem:[#allocation5 + $0x24] sm:$0xf] %v565
    %630 = vst [vmem:[#allocation5 + $0x28] sm:$0xf] %v566
    %631 = vst [vmem:[#allocation5 + $0x2c] sm:$0xf] %v567
    %632 = vst [vmem:[#allocation5 + $0x30] sm:$0xf] %v568
    %633 = vst [vmem:[#allocation5 + $0x34] sm:$0xf] %v569
    %634 = vst [vmem:[#allocation5 + $0x38] sm:$0xf] %v570
    %635 = vst [vmem:[#allocation5 + $0x3c] sm:$0xf] %v571
    %636 = vst [vmem:[#allocation5 + $0x40] sm:$0xf] %v572
    %637 = vst [vmem:[#allocation5 + $0x44] sm:$0xf] %v573
    %638 = vst [vmem:[#allocation5 + $0x48] sm:$0xf] %v574
    %639 = vst [vmem:[#allocation5 + $0x4c] sm:$0xf] %v575
    %640 = vst [vmem:[#allocation5 + $0x50] sm:$0xf] %v576
    %641 = vst [vmem:[#allocation5 + $0x54] sm:$0xf] %v577
    %642 = vst [vmem:[#allocation5 + $0x58] sm:$0xf] %v578
    %643 = vst [vmem:[#allocation5 + $0x5c] sm:$0xf] %v579
    %644 = vst [vmem:[#allocation5 + $0x60] sm:$0xf] %v580
    %645 = vst [vmem:[#allocation5 + $0x64] sm:$0xf] %v581
    %646 = vst [vmem:[#allocation5 + $0x68] sm:$0xf] %v582
    %647 = vst [vmem:[#allocation5 + $0x6c] sm:$0xf] %v583
    %648 = vst [vmem:[#allocation5 + $0x70] sm:$0xf] %v584
    %649 = vst [vmem:[#allocation5 + $0x74] sm:$0xf] %v585
    %650 = vst [vmem:[#allocation5 + $0x78] sm:$0xf] %v586
    %651 = vst [vmem:[#allocation5 + $0x7c] sm:$0xf] %v587
    // Predicated region
    $region18: #{tpu_custom_call.1} parent=1 // pred_check
      _
    $region19: #{tpu_custom_call.1} parent=1 // pred_check_branch
      %653 = sbr.rel (0) target = $region21
    $region20: #{tpu_custom_call.1} parent=1 // pred_region
      %s655 = ssub.s32 2048, 2048
      %656 = vsyncadd [#allocation4], %s655
      %s657 = sshll.u32 [#allocation5], 4
      %s658 = int_to_ptr.vmem [resolvable:$true] %s657
      %663 = dma.vmem_to_hbm [thread:$0]  %s658, 2048, %s3, [#allocation4], 64, 64, 4
    $region21: #{tpu_custom_call.1} parent=1 // pred_fallthru
      _
    // Predicated region
    $region22: #{tpu_custom_call.1} parent=1 // pred_check
      _
    $region23: #{tpu_custom_call.1} parent=1 // pred_check_branch
      %665 = sbr.rel (0) target = $region25
    $region24: #{tpu_custom_call.1} parent=1 // pred_region
      %666 = dma.done [#allocation4], 2048
    $region25: #{tpu_custom_call.1} parent=1 // pred_fallthru
      _
    %667 = vsyncpa [#allocation3], 1
    %668 = vsyncpa [#allocation4], 1

</llo_original>
